<compile_context>
chip_gen: v7x
topology: tpu7x:2x2x1
jax: 0.10.0
libtpu: 0.0.40
codegen_flags: <defaults>
</compile_context>

<pallas_src>
import jax
import jax.numpy as jnp
from jax import lax
from jax.experimental import pallas as pl
from jax.experimental.pallas import tpu as pltpu

S, B, C = 7, 2, 20
LAMBDA_COORD = 5.0
LAMBDA_NOOBJ = 0.5
F = 5 * B + C          # 30 channels
FP = 32                # channels padded to a multiple of 8 sublanes


def _round_up(x, m):
    return ((x + m - 1) // m) * m


def yolo_loss_ref(preds, targets):
    """Pure-JAX statement of the (documented) loss semantics."""
    p = preds.reshape(-1, F).astype(jnp.float32)
    t = targets.reshape(-1, F).astype(jnp.float32)
    obj = (t[:, 4] > 0).astype(jnp.float32)
    noobj = 1.0 - obj

    coord = 0.0
    for b in range(B):
        dxy = p[:, 5 * b:5 * b + 2] - t[:, 5 * b:5 * b + 2]
        dwh = (jnp.sqrt(p[:, 5 * b + 2:5 * b + 4])
               - jnp.sqrt(t[:, 5 * b + 2:5 * b + 4]))
        coord = coord + jnp.sum(jnp.sum(dxy ** 2, -1) * obj)
        coord = coord + jnp.sum(jnp.sum(dwh ** 2, -1) * obj)

    conf_d2 = jnp.sum((p[:, 4:5 * B] - t[:, 4:5 * B]) ** 2, -1)
    cls_d2 = jnp.sum((p[:, 5 * B:] - t[:, 5 * B:]) ** 2, -1)

    return (LAMBDA_COORD * coord
            + jnp.sum(conf_d2 * obj)
            + LAMBDA_NOOBJ * jnp.sum(conf_d2 * noobj)
            + jnp.sum(cls_d2 * obj))


def _yolo_loss_kernel(p_ref, t_ref, out_ref, acc_ref):
    j = pl.program_id(1)

    @pl.when(j == 0)
    def _init():
        acc_ref[...] = jnp.zeros_like(acc_ref)

    p = p_ref[...].astype(jnp.float32)                    # (FP, TR)
    t = t_ref[...].astype(jnp.float32)
    tr = p.shape[1]

    # Per-cell object mask from the target's box-0 confidence channel.
    obj_b = t[4:5, :] > 0.0                               # (1, TR) bool
    obj = obj_b.astype(jnp.float32)

    # Per-channel weights (ORIGINAL channel order), tiny (FP, 1) columns.
    r = lax.broadcasted_iota(jnp.int32, (FP, 1), 0)
    is_conf = (r >= 4) & (r <= 9)                         # literal slice [4 : 5*B]
    is_xy = (r <= 1) | ((r >= 5) & (r <= 6))              # x, y of box 0 / box 1
    is_cls = (r >= 10) & (r < F)                          # class scores
    w_obj = (jnp.where(is_xy, LAMBDA_COORD, 0.0)
             + jnp.where(is_conf, 1.0, 0.0)
             + jnp.where(is_cls, 1.0, 0.0))
    w_noobj = jnp.where(is_conf, LAMBDA_NOOBJ, 0.0)
    w = w_noobj + obj * (w_obj - w_noobj)                 # (FP, TR) via broadcast

    # Single weighted reduction over the raw squared differences.
    d = p - t
    c_raw = d * d * w                                     # (FP, TR)

    # sqrt(w/h) coordinate term.  w/h channels (2, 3, 7, 8) live in the first
    # two sublane groups; slice rows 0:16 (aligned, no relayout) and zero the
    # non-w/h / no-object elements BEFORE the sqrt so the kernel never sqrts
    # values the reference would not.
    r16 = lax.broadcasted_iota(jnp.int32, (16, 1), 0)
    wh_rows = ((r16 >= 2) & (r16 <= 3)) | ((r16 >= 7) & (r16 <= 8))
    sel = wh_rows & obj_b                                 # (16, TR) bool
    dwh = (jnp.sqrt(jnp.where(sel, p[0:16, :], 0.0))
           - jnp.sqrt(jnp.where(sel, t[0:16, :], 0.0)))
    c_wh = LAMBDA_COORD * (dwh * dwh)                     # (16, TR)

    # Fold 128-lane groups with plain VPU adds (no per-tile XLU tree).
    def lane_fold(x):
        acc = x[:, 0:128]
        for k in range(1, tr // 128):
            acc = acc + x[:, k * 128:(k + 1) * 128]
        return acc

    f_raw = lane_fold(c_raw)                              # (FP, 128)
    f_wh = lane_fold(c_wh)                                # (16, 128)

    acc_ref[...] += (f_raw[0:8] + f_raw[8:16] + f_raw[16:24] + f_raw[24:32]
                     + f_wh[0:8] + f_wh[8:16])            # (8, 128)

    @pl.when(j == pl.num_programs(1) - 1)
    def _finalize():
        out_ref[...] = acc_ref[...]                       # lane-dense, once per chunk


def _lane_tile(R, tile_r, itemsize):
    """Largest 128-multiple lane tile whose double-buffered input blocks fit a
    conservative VMEM budget (respects v7x's smaller VMEM)."""
    try:
        vmem_bytes = int(getattr(pltpu.get_tpu_info(), "vmem_capacity_bytes",
                                 64 * 1024 * 1024))
    except Exception:
        vmem_bytes = 64 * 1024 * 1024
    budget = min(8 * 1024 * 1024, vmem_bytes // 8)        # 2 inputs x 2 buffers
    cap = (budget // (2 * 2 * FP * itemsize)) // 128 * 128
    tr = min(tile_r, max(cap, 128), _round_up(R, 128))
    return max(128, (tr // 128) * 128)


def yolo_loss(preds, targets, *, tile_r=32768, min_pallas_cells=512):
    """preds, targets: (N, S, S, 5*B + C).  Returns scalar f32 loss."""
    N = preds.shape[0]
    assert preds.shape == (N, S, S, F) and targets.shape == preds.shape
    R = N * S * S

    # Tiny inputs: the pallas_call + prep passes are pure fixed overhead.
    if R < min_pallas_cells:
        return yolo_loss_ref(preds, targets)

    itemsize = preds.dtype.itemsize
    TR = _lane_tile(R, tile_r, itemsize)
    num_tiles = -(-R // TR)
    P = 2 if num_tiles >= 2 else 1          # feed both TensorCores on v7x
    T = -(-num_tiles // P)
    Rp = P * T * TR

    def prep(x):
        # One fused reshape -> transpose -> zero-pad pass; keeps input dtype
        # (feed bf16 directly if the network emits it; kernel upcasts).
        return jnp.pad(x.reshape(R, F).T, ((0, FP - F), (0, Rp - R)))

    p2 = prep(preds)
    t2 = prep(targets)

    out = pl.pallas_call(
        _yolo_loss_kernel,
        out_shape=jax.ShapeDtypeStruct((P * 8, 128), jnp.float32),
        grid=(P, T),
        in_specs=[
            pl.BlockSpec((FP, TR), lambda pi, j: (0, pi * T + j)),
            pl.BlockSpec((FP, TR), lambda pi, j: (0, pi * T + j)),
        ],
        out_specs=pl.BlockSpec((8, 128), lambda pi, j: (pi, 0)),
        scratch_shapes=[pltpu.VMEM((8, 128), jnp.float32)],
        compiler_params=pltpu.CompilerParams(
            dimension_semantics=("parallel", "arbitrary"),
            vmem_limit_bytes=32 * 1024 * 1024),
    )(p2, t2)
    return jnp.sum(out)


if __name__ == "__main__":
    key = jax.random.PRNGKey(0)
    k_p, k_t, k_m = jax.random.split(key, 3)

    N = 16                                  # R = N*S*S = 784 cells -> kernel path
    # strictly-positive w/h so the sqrt stays real-valued (as in the original)
    preds = jax.random.uniform(k_p, (N, S, S, F), jnp.float32, 0.05, 1.0)
    targets = jax.random.uniform(k_t, (N, S, S, F), jnp.float32, 0.05, 1.0)
    # roughly half the cells contain an object (target conf of box 0 > 0)
    obj_cells = (jax.random.uniform(k_m, (N, S, S)) > 0.5).astype(jnp.float32)
    targets = targets.at[..., 4].set(targets[..., 4] * obj_cells)

    ref = yolo_loss_ref(preds, targets)

    # Default (large) lane tile: single-tile grid.
    loss = yolo_loss(preds, targets)
    jax.block_until_ready(loss)
    assert jnp.allclose(loss, ref, rtol=1e-3, atol=1e-2), (loss, ref)

    # Small tile to exercise the multi-tile accumulation + parallel chunk axis.
    loss_mt = yolo_loss(preds, targets, tile_r=256)
    jax.block_until_ready(loss_mt)
    assert jnp.allclose(loss_mt, ref, rtol=1e-3, atol=1e-2), (loss_mt, ref)

    # Tiny batch takes the pure-XLA fallback (fixed-overhead regime).
    loss_small = yolo_loss(preds[:2], targets[:2])
    jax.block_until_ready(loss_small)
    assert jnp.allclose(loss_small, yolo_loss_ref(preds[:2], targets[:2]),
                        rtol=1e-3, atol=1e-2)

    print("KERNEL_OK")
</pallas_src>

<mosaic_0001>
module attributes {stable_mosaic.version = 11 : i64} {
  func.func @_yolo_loss_kernel(%arg0: i32, %arg1: i32, %arg2: memref<32x896xf32, #tpu.memory_space<vmem>>, %arg3: memref<32x896xf32, #tpu.memory_space<vmem>>, %arg4: memref<8x128xf32, #tpu.memory_space<vmem>>, %arg5: memref<8x128xf32, #tpu.memory_space<vmem>>) attributes {dimension_semantics = [#tpu.dimension_semantics<parallel>, #tpu.dimension_semantics<arbitrary>], iteration_bounds = array<i64: 1, 1>, scalar_prefetch = 0 : i64, scratch_operands = 1 : i64, tpu.core_type = #tpu.core_type<tc>, window_params = [{transform_indices = @transform_0, window_bounds = array<i64: 32, 896>}, {transform_indices = @transform_1, window_bounds = array<i64: 32, 896>}, {transform_indices = @transform_2, window_bounds = array<i64: 8, 128>}]} {
    %c0_i32 = arith.constant 0 : i32
    %0 = arith.cmpi eq, %arg1, %c0_i32 : i32
    %1 = arith.extui %0 : i1 to i32
    %c0_i32_0 = arith.constant 0 : i32
    %2 = arith.cmpi ne, %1, %c0_i32_0 : i32
    scf.if %2 {
      %cst_21 = arith.constant 0.000000e+00 : f32
      %122 = vector.broadcast %cst_21 : f32 to vector<8x128xf32>
      %c0_22 = arith.constant 0 : index
      %c0_23 = arith.constant 0 : index
      %123 = vector.load %arg5[%c0_22, %c0_23] : memref<8x128xf32, #tpu.memory_space<vmem>>, vector<8x128xf32>
      tpu.vector_store %arg5[%c0_22, %c0_23], %122 {strides = array<i32>} : memref<8x128xf32, #tpu.memory_space<vmem>>, vector<8x128xf32>,
    } else {
    }
    %c0 = arith.constant 0 : index
    %c0_1 = arith.constant 0 : index
    %3 = vector.load %arg2[%c0, %c0_1] : memref<32x896xf32, #tpu.memory_space<vmem>>, vector<32x896xf32>
    %c0_2 = arith.constant 0 : index
    %c0_3 = arith.constant 0 : index
    %4 = vector.load %arg3[%c0_2, %c0_3] : memref<32x896xf32, #tpu.memory_space<vmem>>, vector<32x896xf32>
    %5 = vector.extract_strided_slice %4 {offsets = [4, 0], sizes = [1, 896], strides = [1, 1]} : vector<32x896xf32> to vector<1x896xf32>
    %cst = arith.constant 0.000000e+00 : f32
    %6 = vector.broadcast %cst : f32 to vector<1x896xf32>
    %7 = arith.cmpf ogt, %5, %6 : vector<1x896xf32>
    %8 = arith.extui %7 : vector<1x896xi1> to vector<1x896xi32>
    %9 = arith.sitofp %8 : vector<1x896xi32> to vector<1x896xf32>
    %10 = tpu.iota {dimensions = array<i32: 0>} : vector<32x1xi32>
    %c4_i32 = arith.constant 4 : i32
    %11 = vector.broadcast %c4_i32 : i32 to vector<32x1xi32>
    %12 = arith.cmpi sge, %10, %11 : vector<32x1xi32>
    %c9_i32 = arith.constant 9 : i32
    %13 = vector.broadcast %c9_i32 : i32 to vector<32x1xi32>
    %14 = arith.cmpi sle, %10, %13 : vector<32x1xi32>
    %15 = arith.andi %12, %14 : vector<32x1xi1>
    %c1_i32 = arith.constant 1 : i32
    %16 = vector.broadcast %c1_i32 : i32 to vector<32x1xi32>
    %17 = arith.cmpi sle, %10, %16 : vector<32x1xi32>
    %c5_i32 = arith.constant 5 : i32
    %18 = vector.broadcast %c5_i32 : i32 to vector<32x1xi32>
    %19 = arith.cmpi sge, %10, %18 : vector<32x1xi32>
    %c6_i32 = arith.constant 6 : i32
    %20 = vector.broadcast %c6_i32 : i32 to vector<32x1xi32>
    %21 = arith.cmpi sle, %10, %20 : vector<32x1xi32>
    %22 = arith.andi %19, %21 : vector<32x1xi1>
    %23 = arith.ori %17, %22 : vector<32x1xi1>
    %c10_i32 = arith.constant 10 : i32
    %24 = vector.broadcast %c10_i32 : i32 to vector<32x1xi32>
    %25 = arith.cmpi sge, %10, %24 : vector<32x1xi32>
    %c30_i32 = arith.constant 30 : i32
    %26 = vector.broadcast %c30_i32 : i32 to vector<32x1xi32>
    %27 = arith.cmpi slt, %10, %26 : vector<32x1xi32>
    %28 = arith.andi %25, %27 : vector<32x1xi1>
    %cst_4 = arith.constant 5.000000e+00 : f32
    %cst_5 = arith.constant 0.000000e+00 : f32
    %29 = vector.broadcast %cst_4 : f32 to vector<32x1xf32>
    %30 = vector.broadcast %cst_5 : f32 to vector<32x1xf32>
    %31 = arith.select %23, %29, %30 : vector<32x1xi1>, vector<32x1xf32>
    %cst_6 = arith.constant 1.000000e+00 : f32
    %cst_7 = arith.constant 0.000000e+00 : f32
    %32 = vector.broadcast %cst_6 : f32 to vector<32x1xf32>
    %33 = vector.broadcast %cst_7 : f32 to vector<32x1xf32>
    %34 = arith.select %15, %32, %33 : vector<32x1xi1>, vector<32x1xf32>
    %35 = arith.addf %31, %34 : vector<32x1xf32>
    %cst_8 = arith.constant 1.000000e+00 : f32
    %cst_9 = arith.constant 0.000000e+00 : f32
    %36 = vector.broadcast %cst_8 : f32 to vector<32x1xf32>
    %37 = vector.broadcast %cst_9 : f32 to vector<32x1xf32>
    %38 = arith.select %28, %36, %37 : vector<32x1xi1>, vector<32x1xf32>
    %39 = arith.addf %35, %38 : vector<32x1xf32>
    %cst_10 = arith.constant 5.000000e-01 : f32
    %cst_11 = arith.constant 0.000000e+00 : f32
    %40 = vector.broadcast %cst_10 : f32 to vector<32x1xf32>
    %41 = vector.broadcast %cst_11 : f32 to vector<32x1xf32>
    %42 = arith.select %15, %40, %41 : vector<32x1xi1>, vector<32x1xf32>
    %43 = arith.subf %39, %42 : vector<32x1xf32>
    %44 = vector.broadcast %9 : vector<1x896xf32> to vector<32x896xf32>
    %45 = vector.broadcast %43 : vector<32x1xf32> to vector<32x896xf32>
    %46 = arith.mulf %44, %45 : vector<32x896xf32>
    %47 = vector.broadcast %42 : vector<32x1xf32> to vector<32x896xf32>
    %48 = arith.addf %47, %46 : vector<32x896xf32>
    %49 = arith.subf %3, %4 : vector<32x896xf32>
    %50 = arith.mulf %49, %49 : vector<32x896xf32>
    %51 = arith.mulf %50, %48 : vector<32x896xf32>
    %52 = tpu.iota {dimensions = array<i32: 0>} : vector<16x1xi32>
    %c2_i32 = arith.constant 2 : i32
    %53 = vector.broadcast %c2_i32 : i32 to vector<16x1xi32>
    %54 = arith.cmpi sge, %52, %53 : vector<16x1xi32>
    %c3_i32 = arith.constant 3 : i32
    %55 = vector.broadcast %c3_i32 : i32 to vector<16x1xi32>
    %56 = arith.cmpi sle, %52, %55 : vector<16x1xi32>
    %57 = arith.andi %54, %56 : vector<16x1xi1>
    %c7_i32 = arith.constant 7 : i32
    %58 = vector.broadcast %c7_i32 : i32 to vector<16x1xi32>
    %59 = arith.cmpi sge, %52, %58 : vector<16x1xi32>
    %c8_i32 = arith.constant 8 : i32
    %60 = vector.broadcast %c8_i32 : i32 to vector<16x1xi32>
    %61 = arith.cmpi sle, %52, %60 : vector<16x1xi32>
    %62 = arith.andi %59, %61 : vector<16x1xi1>
    %63 = arith.ori %57, %62 : vector<16x1xi1>
    %64 = vector.broadcast %63 : vector<16x1xi1> to vector<16x896xi1>
    %65 = vector.broadcast %7 : vector<1x896xi1> to vector<16x896xi1>
    %66 = arith.andi %64, %65 : vector<16x896xi1>
    %67 = vector.extract_strided_slice %3 {offsets = [0, 0], sizes = [16, 896], strides = [1, 1]} : vector<32x896xf32> to vector<16x896xf32>
    %cst_12 = arith.constant 0.000000e+00 : f32
    %68 = vector.broadcast %cst_12 : f32 to vector<16x896xf32>
    %69 = arith.select %66, %67, %68 : vector<16x896xi1>, vector<16x896xf32>
    %70 = math.sqrt %69 : vector<16x896xf32>
    %71 = vector.extract_strided_slice %4 {offsets = [0, 0], sizes = [16, 896], strides = [1, 1]} : vector<32x896xf32> to vector<16x896xf32>
    %cst_13 = arith.constant 0.000000e+00 : f32
    %72 = vector.broadcast %cst_13 : f32 to vector<16x896xf32>
    %73 = arith.select %66, %71, %72 : vector<16x896xi1>, vector<16x896xf32>
    %74 = math.sqrt %73 : vector<16x896xf32>
    %75 = arith.subf %70, %74 : vector<16x896xf32>
    %76 = arith.mulf %75, %75 : vector<16x896xf32>
    %cst_14 = arith.constant 5.000000e+00 : f32
    %77 = vector.broadcast %cst_14 : f32 to vector<16x896xf32>
    %78 = arith.mulf %77, %76 : vector<16x896xf32>
    %79 = vector.extract_strided_slice %51 {offsets = [0, 0], sizes = [32, 128], strides = [1, 1]} : vector<32x896xf32> to vector<32x128xf32>
    %80 = vector.extract_strided_slice %51 {offsets = [0, 128], sizes = [32, 128], strides = [1, 1]} : vector<32x896xf32> to vector<32x128xf32>
    %81 = arith.addf %79, %80 : vector<32x128xf32>
    %82 = vector.extract_strided_slice %51 {offsets = [0, 256], sizes = [32, 128], strides = [1, 1]} : vector<32x896xf32> to vector<32x128xf32>
    %83 = arith.addf %81, %82 : vector<32x128xf32>
    %84 = vector.extract_strided_slice %51 {offsets = [0, 384], sizes = [32, 128], strides = [1, 1]} : vector<32x896xf32> to vector<32x128xf32>
    %85 = arith.addf %83, %84 : vector<32x128xf32>
    %86 = vector.extract_strided_slice %51 {offsets = [0, 512], sizes = [32, 128], strides = [1, 1]} : vector<32x896xf32> to vector<32x128xf32>
    %87 = arith.addf %85, %86 : vector<32x128xf32>
    %88 = vector.extract_strided_slice %51 {offsets = [0, 640], sizes = [32, 128], strides = [1, 1]} : vector<32x896xf32> to vector<32x128xf32>
    %89 = arith.addf %87, %88 : vector<32x128xf32>
    %90 = vector.extract_strided_slice %51 {offsets = [0, 768], sizes = [32, 128], strides = [1, 1]} : vector<32x896xf32> to vector<32x128xf32>
    %91 = arith.addf %89, %90 : vector<32x128xf32>
    %92 = vector.extract_strided_slice %78 {offsets = [0, 0], sizes = [16, 128], strides = [1, 1]} : vector<16x896xf32> to vector<16x128xf32>
    %93 = vector.extract_strided_slice %78 {offsets = [0, 128], sizes = [16, 128], strides = [1, 1]} : vector<16x896xf32> to vector<16x128xf32>
    %94 = arith.addf %92, %93 : vector<16x128xf32>
    %95 = vector.extract_strided_slice %78 {offsets = [0, 256], sizes = [16, 128], strides = [1, 1]} : vector<16x896xf32> to vector<16x128xf32>
    %96 = arith.addf %94, %95 : vector<16x128xf32>
    %97 = vector.extract_strided_slice %78 {offsets = [0, 384], sizes = [16, 128], strides = [1, 1]} : vector<16x896xf32> to vector<16x128xf32>
    %98 = arith.addf %96, %97 : vector<16x128xf32>
    %99 = vector.extract_strided_slice %78 {offsets = [0, 512], sizes = [16, 128], strides = [1, 1]} : vector<16x896xf32> to vector<16x128xf32>
    %100 = arith.addf %98, %99 : vector<16x128xf32>
    %101 = vector.extract_strided_slice %78 {offsets = [0, 640], sizes = [16, 128], strides = [1, 1]} : vector<16x896xf32> to vector<16x128xf32>
    %102 = arith.addf %100, %101 : vector<16x128xf32>
    %103 = vector.extract_strided_slice %78 {offsets = [0, 768], sizes = [16, 128], strides = [1, 1]} : vector<16x896xf32> to vector<16x128xf32>
    %104 = arith.addf %102, %103 : vector<16x128xf32>
    %c0_15 = arith.constant 0 : index
    %c0_16 = arith.constant 0 : index
    %105 = vector.load %arg5[%c0_15, %c0_16] : memref<8x128xf32, #tpu.memory_space<vmem>>, vector<8x128xf32>
    %106 = vector.extract_strided_slice %91 {offsets = [0, 0], sizes = [8, 128], strides = [1, 1]} : vector<32x128xf32> to vector<8x128xf32>
    %107 = vector.extract_strided_slice %91 {offsets = [8, 0], sizes = [8, 128], strides = [1, 1]} : vector<32x128xf32> to vector<8x128xf32>
    %108 = arith.addf %106, %107 : vector<8x128xf32>
    %109 = vector.extract_strided_slice %91 {offsets = [16, 0], sizes = [8, 128], strides = [1, 1]} : vector<32x128xf32> to vector<8x128xf32>
    %110 = arith.addf %108, %109 : vector<8x128xf32>
    %111 = vector.extract_strided_slice %91 {offsets = [24, 0], sizes = [8, 128], strides = [1, 1]} : vector<32x128xf32> to vector<8x128xf32>
    %112 = arith.addf %110, %111 : vector<8x128xf32>
    %113 = vector.extract_strided_slice %104 {offsets = [0, 0], sizes = [8, 128], strides = [1, 1]} : vector<16x128xf32> to vector<8x128xf32>
    %114 = arith.addf %112, %113 : vector<8x128xf32>
    %115 = vector.extract_strided_slice %104 {offsets = [8, 0], sizes = [8, 128], strides = [1, 1]} : vector<16x128xf32> to vector<8x128xf32>
    %116 = arith.addf %114, %115 : vector<8x128xf32>
    %117 = arith.addf %105, %116 : vector<8x128xf32>
    %c0_17 = arith.constant 0 : index
    %c0_18 = arith.constant 0 : index
    %118 = vector.load %arg5[%c0_17, %c0_18] : memref<8x128xf32, #tpu.memory_space<vmem>>, vector<8x128xf32>
    tpu.vector_store %arg5[%c0_17, %c0_18], %117 {strides = array<i32>} : memref<8x128xf32, #tpu.memory_space<vmem>>, vector<8x128xf32>,
    %c0_i32_19 = arith.constant 0 : i32
    %119 = arith.cmpi eq, %arg1, %c0_i32_19 : i32
    %120 = arith.extui %119 : i1 to i32
    %c0_i32_20 = arith.constant 0 : i32
    %121 = arith.cmpi ne, %120, %c0_i32_20 : i32
    scf.if %121 {
      %c0_21 = arith.constant 0 : index
      %c0_22 = arith.constant 0 : index
      %122 = vector.load %arg5[%c0_21, %c0_22] : memref<8x128xf32, #tpu.memory_space<vmem>>, vector<8x128xf32>
      %c0_23 = arith.constant 0 : index
      %c0_24 = arith.constant 0 : index
      %123 = vector.load %arg4[%c0_23, %c0_24] : memref<8x128xf32, #tpu.memory_space<vmem>>, vector<8x128xf32>
      tpu.vector_store %arg4[%c0_23, %c0_24], %122 {strides = array<i32>} : memref<8x128xf32, #tpu.memory_space<vmem>>, vector<8x128xf32>,
    } else {
    }
    return
  }
  func.func @transform_0(%arg0: i32, %arg1: i32) -> (i32, i32) {
    %c1_i32 = arith.constant 1 : i32
    %0 = arith.muli %arg0, %c1_i32 : i32
    %1 = arith.addi %0, %arg1 : i32
    %c0_i32 = arith.constant 0 : i32
    %c0_i32_0 = arith.constant 0 : i32
    return %c0_i32, %1 : i32, i32
  }
  func.func @transform_1(%arg0: i32, %arg1: i32) -> (i32, i32) {
    %c1_i32 = arith.constant 1 : i32
    %0 = arith.muli %arg0, %c1_i32 : i32
    %1 = arith.addi %0, %arg1 : i32
    %c0_i32 = arith.constant 0 : i32
    %c0_i32_0 = arith.constant 0 : i32
    return %c0_i32, %1 : i32, i32
  }
  func.func @transform_2(%arg0: i32, %arg1: i32) -> (i32, i32) {
    %c0_i32 = arith.constant 0 : i32
    %c0_i32_0 = arith.constant 0 : i32
    return %arg0, %c0_i32 : i32, i32
  }
}

</mosaic_0001>

<llo_original>
// kernel: tpu_custom_call.1
$region0: #{tpu_custom_call.1}
  #allocation0 [shape = 'u32[]', space=smem, size = 0x4, offset = 0x4, fixed_abs, tag = 'smem constant byte address 0x4 - core index']
  #allocation1 [shape = 'u32[144,128]{1,0:T(1,128)}', space=vmem, size = 0x12000, scoped, tag = 'internal scratch']
  #allocation2 [shape = 'f32[8,128]{1,0:T(8,128)}', space=vmem, size = 0x1000, scoped, tag = 'scratch operand']
  %s0 = inlined_call_operand.hbm [shape: f32[32,896], index: 0, kind: input, shape index: {}]
  %s1 = inlined_call_operand.hbm [shape: f32[32,896], index: 1, kind: input, shape index: {}]
  %s2 = inlined_call_operand.hbm [shape: f32[8,128], index: 2, kind: output, shape index: {}]
  %s3 = sld [smem:[#allocation0]]
  $region34: #{tpu_custom_call.1} parent=0
    _
  %s5 = ssub.s32 1, %s3
  %s6 = scalar_select 0, %s5, %s3
  $region1: #{tpu_custom_call.1} parent=0
    #allocation3 [shape = 'u8[114688]{0}', space=vmem, size = 0x1c000, scoped, tag = 'input window, operand 0, single buffered']
    #allocation4 [shape = 's32[1]{0}', space=sflag, size = 0x4, scoped, tag = 'scoped memory for tpu_custom_call.1']
    #allocation5 [shape = 's32[1]{0}', space=sflag, size = 0x4, scoped, tag = 'scoped memory for tpu_custom_call.1']
    #allocation6 [shape = 'u8[114688]{0}', space=vmem, size = 0x1c000, scoped, tag = 'input window, operand 1, single buffered']
    #allocation7 [shape = 's32[1]{0}', space=sflag, size = 0x4, scoped, tag = 'scoped memory for tpu_custom_call.1']
    #allocation8 [shape = 'u8[4096]{0}', space=vmem, size = 0x1000, scoped, tag = 'output window, operand 0, single buffered']
    %7 = vsyncpa [#allocation4], 0
    %8 = vsyncpa [#allocation7], 0
    %9 = vsyncpa [#allocation5], 0
    // Predicated region
    $region2: #{tpu_custom_call.1} parent=1 // pred_check
      _
    $region3: #{tpu_custom_call.1} parent=1 // pred_check_branch
      %11 = sbr.rel (0) target = $region5
    $region4: #{tpu_custom_call.1} parent=1 // pred_region
      %s12 = sadd.s32 0, 0
      %s13 = smul.u32 7, %s12
      %s15 = ssub.s32 3584, 3584
      %16 = vsyncadd [#allocation4], %s15
      %s17 = smul.addr %s13, 128
      %s18 = scalar_lea.hbm %s0, %s17
      %s19 = sshll.u32 [#allocation3], 4
      %s20 = int_to_ptr.vmem [resolvable:$true] %s19
      %25 = dma.hbm_to_vmem [thread:$0]  %s18, 3584, %s20, [#allocation4], 896, 896, 56
    $region5: #{tpu_custom_call.1} parent=1 // pred_fallthru
      _
    // Predicated region
    $region6: #{tpu_custom_call.1} parent=1 // pred_check
      _
    $region7: #{tpu_custom_call.1} parent=1 // pred_check_branch
      %27 = sbr.rel (0) target = $region9
    $region8: #{tpu_custom_call.1} parent=1 // pred_region
      %s28 = sadd.s32 0, 0
      %s29 = smul.u32 7, %s28
      %s31 = ssub.s32 3584, 3584
      %32 = vsyncadd [#allocation7], %s31
      %s33 = smul.addr %s29, 128
      %s34 = scalar_lea.hbm %s1, %s33
      %s35 = sshll.u32 [#allocation6], 4
      %s36 = int_to_ptr.vmem [resolvable:$true] %s35
      %41 = dma.hbm_to_vmem [thread:$0]  %s34, 3584, %s36, [#allocation7], 896, 896, 56
    $region9: #{tpu_custom_call.1} parent=1 // pred_fallthru
      _
    // Predicated region
    $region10: #{tpu_custom_call.1} parent=1 // pred_check
      _
    $region11: #{tpu_custom_call.1} parent=1 // pred_check_branch
      %43 = sbr.rel (0) target = $region13
    $region12: #{tpu_custom_call.1} parent=1 // pred_region
      %44 = dma.done [#allocation4], 3584
    $region13: #{tpu_custom_call.1} parent=1 // pred_fallthru
      _
    // Predicated region
    $region14: #{tpu_custom_call.1} parent=1 // pred_check
      _
    $region15: #{tpu_custom_call.1} parent=1 // pred_check_branch
      %46 = sbr.rel (0) target = $region17
    $region16: #{tpu_custom_call.1} parent=1 // pred_region
      %47 = dma.done [#allocation7], 3584
    $region17: #{tpu_custom_call.1} parent=1 // pred_fallthru
      _
    %s48 = sadd.s32 0, 0
    %s49 = smul.u32 7, %s48
    %s50 = sadd.s32 0, 0
    %s51 = smul.u32 7, %s50
    %p52 = scmp.eq.s32.totalorder 0, 0
    // Predicated region
    $region18: #{tpu_custom_call.1} parent=1 // pred_check
      %p53 = pneg %p52
    $region19: #{tpu_custom_call.1} parent=1 // pred_check_branch
      %55 = sbr.rel (%p53) target = $region21
    $region20: #{tpu_custom_call.1} parent=1 // pred_region
      %56 = vst [vmem:[#allocation2] sm:$0xff] 0.0
    $region21: #{tpu_custom_call.1} parent=1 // pred_fallthru
      _
    %v57 = vld [vmem:[#allocation3] sm:$0xff]
    %v58 = vld [vmem:[#allocation3 + $0x8] sm:$0xff]
    %v59 = vld [vmem:[#allocation3 + $0x10] sm:$0xff]
    %v60 = vld [vmem:[#allocation3 + $0x18] sm:$0xff]
    %v61 = vld [vmem:[#allocation3 + $0x20] sm:$0xff]
    %v62 = vld [vmem:[#allocation3 + $0x28] sm:$0xff]
    %v63 = vld [vmem:[#allocation3 + $0x30] sm:$0xff]
    %v64 = vld [vmem:[#allocation3 + $0x38] sm:$0xff]
    %v65 = vld [vmem:[#allocation3 + $0x40] sm:$0xff]
    %v66 = vld [vmem:[#allocation3 + $0x48] sm:$0xff]
    %v67 = vld [vmem:[#allocation3 + $0x50] sm:$0xff]
    %v68 = vld [vmem:[#allocation3 + $0x58] sm:$0xff]
    %v69 = vld [vmem:[#allocation3 + $0x60] sm:$0xff]
    %v70 = vld [vmem:[#allocation3 + $0x68] sm:$0xff]
    %v71 = vld [vmem:[#allocation3 + $0x70] sm:$0xff]
    %v72 = vld [vmem:[#allocation3 + $0x78] sm:$0xff]
    %v73 = vld [vmem:[#allocation3 + $0x80] sm:$0xff]
    %v74 = vld [vmem:[#allocation3 + $0x88] sm:$0xff]
    %v75 = vld [vmem:[#allocation3 + $0x90] sm:$0xff]
    %v76 = vld [vmem:[#allocation3 + $0x98] sm:$0xff]
    %v77 = vld [vmem:[#allocation3 + $0xa0] sm:$0xff]
    %v78 = vld [vmem:[#allocation3 + $0xa8] sm:$0xff]
    %v79 = vld [vmem:[#allocation3 + $0xb0] sm:$0xff]
    %v80 = vld [vmem:[#allocation3 + $0xb8] sm:$0xff]
    %v81 = vld [vmem:[#allocation3 + $0xc0] sm:$0xff]
    %v82 = vld [vmem:[#allocation3 + $0xc8] sm:$0xff]
    %v83 = vld [vmem:[#allocation3 + $0xd0] sm:$0xff]
    %v84 = vld [vmem:[#allocation3 + $0xd8] sm:$0xff]
    %v85 = vld [vmem:[#allocation6] sm:$0xff]
    %v86 = vld [vmem:[#allocation6 + $0x8] sm:$0xff]
    %v87 = vld [vmem:[#allocation6 + $0x10] sm:$0xff]
    %v88 = vld [vmem:[#allocation6 + $0x18] sm:$0xff]
    %v89 = vld [vmem:[#allocation6 + $0x20] sm:$0xff]
    %v90 = vld [vmem:[#allocation6 + $0x28] sm:$0xff]
    %v91 = vld [vmem:[#allocation6 + $0x30] sm:$0xff]
    %v92 = vld [vmem:[#allocation6 + $0x38] sm:$0xff]
    %v93 = vld [vmem:[#allocation6 + $0x40] sm:$0xff]
    %v94 = vld [vmem:[#allocation6 + $0x48] sm:$0xff]
    %v95 = vld [vmem:[#allocation6 + $0x50] sm:$0xff]
    %v96 = vld [vmem:[#allocation6 + $0x58] sm:$0xff]
    %v97 = vld [vmem:[#allocation6 + $0x60] sm:$0xff]
    %v98 = vld [vmem:[#allocation6 + $0x68] sm:$0xff]
    %v99 = vld [vmem:[#allocation6 + $0x70] sm:$0xff]
    %v100 = vld [vmem:[#allocation6 + $0x78] sm:$0xff]
    %v101 = vld [vmem:[#allocation6 + $0x80] sm:$0xff]
    %v102 = vld [vmem:[#allocation6 + $0x88] sm:$0xff]
    %v103 = vld [vmem:[#allocation6 + $0x90] sm:$0xff]
    %v104 = vld [vmem:[#allocation6 + $0x98] sm:$0xff]
    %v105 = vld [vmem:[#allocation6 + $0xa0] sm:$0xff]
    %v106 = vld [vmem:[#allocation6 + $0xa8] sm:$0xff]
    %v107 = vld [vmem:[#allocation6 + $0xb0] sm:$0xff]
    %v108 = vld [vmem:[#allocation6 + $0xb8] sm:$0xff]
    %v109 = vld [vmem:[#allocation6 + $0xc0] sm:$0xff]
    %v110 = vld [vmem:[#allocation6 + $0xc8] sm:$0xff]
    %v111 = vld [vmem:[#allocation6 + $0xd0] sm:$0xff]
    %v112 = vld [vmem:[#allocation6 + $0xd8] sm:$0xff]
    %vm113 = vcmp.gt.f32.partialorder %v85, 0.0
    %vm114 = vcmp.gt.f32.partialorder %v86, 0.0
    %vm115 = vcmp.gt.f32.partialorder %v87, 0.0
    %vm116 = vcmp.gt.f32.partialorder %v88, 0.0
    %vm117 = vcmp.gt.f32.partialorder %v89, 0.0
    %vm118 = vcmp.gt.f32.partialorder %v90, 0.0
    %vm119 = vcmp.gt.f32.partialorder %v91, 0.0
    %v120 = vsel %vm113, 1, 0
    %v121 = vsel %vm114, 1, 0
    %v122 = vsel %vm115, 1, 0
    %v123 = vsel %vm116, 1, 0
    %v124 = vsel %vm117, 1, 0
    %v125 = vsel %vm118, 1, 0
    %v126 = vsel %vm119, 1, 0
    %v127 = vcvt.s32.f32 %v120
    %v128 = vcvt.s32.f32 %v121
    %v129 = vcvt.s32.f32 %v122
    %v130 = vcvt.s32.f32 %v123
    %v131 = vcvt.s32.f32 %v124
    %v132 = vcvt.s32.f32 %v125
    %v133 = vcvt.s32.f32 %v126
    %v134 = vlaneseq
    %v135 = vshrl.u32 %v134, 7
    %v136 = vadd.s32 %v135, 8
    %v137 = vadd.s32 %v135, 16
    %v138 = vadd.s32 %v135, 24
    %vm139 = vcmp.ge.s32.totalorder %v135, 4
    %vm140 = vcmp.ge.s32.totalorder %v136, 4
    %vm141 = vcmp.ge.s32.totalorder %v137, 4
    %vm142 = vcmp.ge.s32.totalorder %v138, 4
    %vm143 = vcmp.le.s32.totalorder %v135, 9
    %vm144 = vcmp.le.s32.totalorder %v136, 9
    %vm145 = vcmp.le.s32.totalorder %v137, 9
    %vm146 = vcmp.le.s32.totalorder %v138, 9
    %vm147 = vmand %vm139, %vm143
    %vm148 = vmand %vm140, %vm144
    %vm149 = vmand %vm141, %vm145
    %vm150 = vmand %vm142, %vm146
    %vm151 = vcmp.le.s32.totalorder %v135, 1
    %vm152 = vcmp.le.s32.totalorder %v136, 1
    %vm153 = vcmp.le.s32.totalorder %v137, 1
    %vm154 = vcmp.le.s32.totalorder %v138, 1
    %vm155 = vcmp.ge.s32.totalorder %v135, 5
    %vm156 = vcmp.ge.s32.totalorder %v136, 5
    %vm157 = vcmp.ge.s32.totalorder %v137, 5
    %vm158 = vcmp.ge.s32.totalorder %v138, 5
    %vm159 = vcmp.le.s32.totalorder %v135, 6
    %vm160 = vcmp.le.s32.totalorder %v136, 6
    %vm161 = vcmp.le.s32.totalorder %v137, 6
    %vm162 = vcmp.le.s32.totalorder %v138, 6
    %vm163 = vmand %vm155, %vm159
    %vm164 = vmand %vm156, %vm160
    %vm165 = vmand %vm157, %vm161
    %vm166 = vmand %vm158, %vm162
    %vm167 = vmor %vm151, %vm163
    %vm168 = vmor %vm152, %vm164
    %vm169 = vmor %vm153, %vm165
    %vm170 = vmor %vm154, %vm166
    %vm171 = vcmp.ge.s32.totalorder %v135, 10
    %vm172 = vcmp.ge.s32.totalorder %v136, 10
    %vm173 = vcmp.ge.s32.totalorder %v137, 10
    %vm174 = vcmp.ge.s32.totalorder %v138, 10
    %vm175 = vcmp.lt.s32.totalorder %v135, 30
    %vm176 = vcmp.lt.s32.totalorder %v136, 30
    %vm177 = vcmp.lt.s32.totalorder %v137, 30
    %vm178 = vcmp.lt.s32.totalorder %v138, 30
    %vm179 = vmand %vm171, %vm175
    %vm180 = vmand %vm172, %vm176
    %vm181 = vmand %vm173, %vm177
    %vm182 = vmand %vm174, %vm178
    %v183 = vsel %vm167, 5.0, 0.0
    %v184 = vsel %vm168, 5.0, 0.0
    %v185 = vsel %vm169, 5.0, 0.0
    %v186 = vsel %vm170, 5.0, 0.0
    %v187 = vsel %vm147, 1.0, 0.0
    %v188 = vsel %vm148, 1.0, 0.0
    %v189 = vsel %vm149, 1.0, 0.0
    %v190 = vsel %vm150, 1.0, 0.0
    %v191 = vadd.f32 %v183, %v187
    %v192 = vadd.f32 %v184, %v188
    %v193 = vadd.f32 %v185, %v189
    %v194 = vadd.f32 %v186, %v190
    %v195 = vsel %vm179, 1.0, 0.0
    %v196 = vsel %vm180, 1.0, 0.0
    %v197 = vsel %vm181, 1.0, 0.0
    %v198 = vsel %vm182, 1.0, 0.0
    %v199 = vadd.f32 %v191, %v195
    %v200 = vadd.f32 %v192, %v196
    %v201 = vadd.f32 %v193, %v197
    %v202 = vadd.f32 %v194, %v198
    %v203 = vsel %vm147, 0.5, 0.0
    %v204 = vsel %vm148, 0.5, 0.0
    %v205 = vsel %vm149, 0.5, 0.0
    %v206 = vsel %vm150, 0.5, 0.0
    %v207 = vsub.f32 %v199, %v203
    %v208 = vsub.f32 %v200, %v204
    %v209 = vsub.f32 %v201, %v205
    %v210 = vsub.f32 %v202, %v206
    %v211 = vlaneseq
    %v212 = vshrl.u32 %v211, 7
    %v213 = vsub.s32 4, %v212
    %v214 = vrot.slane %v127, %v213
    %v215 = vlaneseq
    %v216 = vshrl.u32 %v215, 7
    %v217 = vsub.s32 4, %v216
    %v218 = vrot.slane %v128, %v217
    %v219 = vlaneseq
    %v220 = vshrl.u32 %v219, 7
    %v221 = vsub.s32 4, %v220
    %v222 = vrot.slane %v129, %v221
    %v223 = vlaneseq
    %v224 = vshrl.u32 %v223, 7
    %v225 = vsub.s32 4, %v224
    %v226 = vrot.slane %v130, %v225
    %v227 = vlaneseq
    %v228 = vshrl.u32 %v227, 7
    %v229 = vsub.s32 4, %v228
    %v230 = vrot.slane %v131, %v229
    %v231 = vlaneseq
    %v232 = vshrl.u32 %v231, 7
    %v233 = vsub.s32 4, %v232
    %v234 = vrot.slane %v132, %v233
    %v235 = vlaneseq
    %v236 = vshrl.u32 %v235, 7
    %v237 = vsub.s32 4, %v236
    %v238 = vrot.slane %v133, %v237
    %v239 = vmul.f32 %v214, %v207
    %v240 = vmul.f32 %v218, %v207
    %v241 = vmul.f32 %v222, %v207
    %v242 = vmul.f32 %v226, %v207
    %v243 = vmul.f32 %v230, %v207
    %v244 = vmul.f32 %v234, %v207
    %v245 = vmul.f32 %v238, %v207
    %v246 = vmul.f32 %v214, %v208
    %v247 = vmul.f32 %v218, %v208
    %v248 = vmul.f32 %v222, %v208
    %v249 = vmul.f32 %v226, %v208
    %v250 = vmul.f32 %v230, %v208
    %v251 = vmul.f32 %v234, %v208
    %v252 = vmul.f32 %v238, %v208
    %v253 = vmul.f32 %v214, %v209
    %v254 = vmul.f32 %v218, %v209
    %v255 = vmul.f32 %v222, %v209
    %v256 = vmul.f32 %v226, %v209
    %v257 = vmul.f32 %v230, %v209
    %v258 = vmul.f32 %v234, %v209
    %v259 = vmul.f32 %v238, %v209
    %v260 = vmul.f32 %v214, %v210
    %v261 = vmul.f32 %v218, %v210
    %v262 = vmul.f32 %v222, %v210
    %v263 = vmul.f32 %v226, %v210
    %v264 = vmul.f32 %v230, %v210
    %v265 = vmul.f32 %v234, %v210
    %v266 = vmul.f32 %v238, %v210
    %v267 = vadd.f32 %v203, %v239
    %v268 = vadd.f32 %v203, %v240
    %v269 = vadd.f32 %v203, %v241
    %v270 = vadd.f32 %v203, %v242
    %v271 = vadd.f32 %v203, %v243
    %v272 = vadd.f32 %v203, %v244
    %v273 = vadd.f32 %v203, %v245
    %v274 = vadd.f32 %v204, %v246
    %v275 = vadd.f32 %v204, %v247
    %v276 = vadd.f32 %v204, %v248
    %v277 = vadd.f32 %v204, %v249
    %v278 = vadd.f32 %v204, %v250
    %v279 = vadd.f32 %v204, %v251
    %v280 = vadd.f32 %v204, %v252
    %v281 = vadd.f32 %v205, %v253
    %v282 = vadd.f32 %v205, %v254
    %v283 = vadd.f32 %v205, %v255
    %v284 = vadd.f32 %v205, %v256
    %v285 = vadd.f32 %v205, %v257
    %v286 = vadd.f32 %v205, %v258
    %v287 = vadd.f32 %v205, %v259
    %v288 = vadd.f32 %v206, %v260
    %v289 = vadd.f32 %v206, %v261
    %v290 = vadd.f32 %v206, %v262
    %v291 = vadd.f32 %v206, %v263
    %v292 = vadd.f32 %v206, %v264
    %v293 = vadd.f32 %v206, %v265
    %v294 = vadd.f32 %v206, %v266
    %v295 = vsub.f32 %v57, %v85
    %v296 = vsub.f32 %v58, %v86
    %v297 = vsub.f32 %v59, %v87
    %v298 = vsub.f32 %v60, %v88
    %v299 = vsub.f32 %v61, %v89
    %v300 = vsub.f32 %v62, %v90
    %v301 = vsub.f32 %v63, %v91
    %v302 = vsub.f32 %v64, %v92
    %v303 = vsub.f32 %v65, %v93
    %v304 = vsub.f32 %v66, %v94
    %v305 = vsub.f32 %v67, %v95
    %v306 = vsub.f32 %v68, %v96
    %v307 = vsub.f32 %v69, %v97
    %v308 = vsub.f32 %v70, %v98
    %v309 = vsub.f32 %v71, %v99
    %v310 = vsub.f32 %v72, %v100
    %v311 = vsub.f32 %v73, %v101
    %v312 = vsub.f32 %v74, %v102
    %v313 = vsub.f32 %v75, %v103
    %v314 = vsub.f32 %v76, %v104
    %v315 = vsub.f32 %v77, %v105
    %v316 = vsub.f32 %v78, %v106
    %v317 = vsub.f32 %v79, %v107
    %v318 = vsub.f32 %v80, %v108
    %v319 = vsub.f32 %v81, %v109
    %v320 = vsub.f32 %v82, %v110
    %v321 = vsub.f32 %v83, %v111
    %v322 = vsub.f32 %v84, %v112
    %v323 = vmul.f32 %v295, %v295
    %v324 = vmul.f32 %v296, %v296
    %v325 = vmul.f32 %v297, %v297
    %v326 = vmul.f32 %v298, %v298
    %v327 = vmul.f32 %v299, %v299
    %v328 = vmul.f32 %v300, %v300
    %v329 = vmul.f32 %v301, %v301
    %v330 = vmul.f32 %v302, %v302
    %v331 = vmul.f32 %v303, %v303
    %v332 = vmul.f32 %v304, %v304
    %v333 = vmul.f32 %v305, %v305
    %v334 = vmul.f32 %v306, %v306
    %v335 = vmul.f32 %v307, %v307
    %v336 = vmul.f32 %v308, %v308
    %v337 = vmul.f32 %v309, %v309
    %v338 = vmul.f32 %v310, %v310
    %v339 = vmul.f32 %v311, %v311
    %v340 = vmul.f32 %v312, %v312
    %v341 = vmul.f32 %v313, %v313
    %v342 = vmul.f32 %v314, %v314
    %v343 = vmul.f32 %v315, %v315
    %v344 = vmul.f32 %v316, %v316
    %v345 = vmul.f32 %v317, %v317
    %v346 = vmul.f32 %v318, %v318
    %v347 = vmul.f32 %v319, %v319
    %v348 = vmul.f32 %v320, %v320
    %v349 = vmul.f32 %v321, %v321
    %v350 = vmul.f32 %v322, %v322
    %v351 = vmul.f32 %v323, %v267
    %v352 = vmul.f32 %v324, %v268
    %v353 = vmul.f32 %v325, %v269
    %v354 = vmul.f32 %v326, %v270
    %v355 = vmul.f32 %v327, %v271
    %v356 = vmul.f32 %v328, %v272
    %v357 = vmul.f32 %v329, %v273
    %v358 = vmul.f32 %v330, %v274
    %v359 = vmul.f32 %v331, %v275
    %v360 = vmul.f32 %v332, %v276
    %v361 = vmul.f32 %v333, %v277
    %v362 = vmul.f32 %v334, %v278
    %v363 = vmul.f32 %v335, %v279
    %v364 = vmul.f32 %v336, %v280
    %v365 = vmul.f32 %v337, %v281
    %v366 = vmul.f32 %v338, %v282
    %v367 = vmul.f32 %v339, %v283
    %v368 = vmul.f32 %v340, %v284
    %v369 = vmul.f32 %v341, %v285
    %v370 = vmul.f32 %v342, %v286
    %v371 = vmul.f32 %v343, %v287
    %v372 = vmul.f32 %v344, %v288
    %v373 = vmul.f32 %v345, %v289
    %v374 = vmul.f32 %v346, %v290
    %v375 = vmul.f32 %v347, %v291
    %v376 = vmul.f32 %v348, %v292
    %v377 = vmul.f32 %v349, %v293
    %v378 = vmul.f32 %v350, %v294
    %vm379 = vcmp.ge.s32.totalorder %v135, 2
    %vm380 = vcmp.ge.s32.totalorder %v136, 2
    %vm381 = vcmp.le.s32.totalorder %v135, 3
    %vm382 = vcmp.le.s32.totalorder %v136, 3
    %vm383 = vmand %vm379, %vm381
    %vm384 = vmand %vm380, %vm382
    %vm385 = vcmp.ge.s32.totalorder %v135, 7
    %vm386 = vcmp.ge.s32.totalorder %v136, 7
    %vm387 = vcmp.le.s32.totalorder %v135, 8
    %vm388 = vcmp.le.s32.totalorder %v136, 8
    %vm389 = vmand %vm385, %vm387
    %vm390 = vmand %vm386, %vm388
    %vm391 = vmor %vm383, %vm389
    %vm392 = vmor %vm384, %vm390
    %v393 = vsel %vm391, 1, 0
    %v394 = vsel %vm392, 1, 0
    %vm395 = vcmp.eq.s32.totalorder %v393, 1
    %vm396 = vcmp.eq.s32.totalorder %v394, 1
    %v397 = vlaneseq
    %v398 = vshrl.u32 %v397, 7
    %v399 = vsub.s32 4, %v398
    %v400 = vrot.slane %v120, %v399
    %v401 = vlaneseq
    %v402 = vshrl.u32 %v401, 7
    %v403 = vsub.s32 4, %v402
    %v404 = vrot.slane %v121, %v403
    %v405 = vlaneseq
    %v406 = vshrl.u32 %v405, 7
    %v407 = vsub.s32 4, %v406
    %v408 = vrot.slane %v122, %v407
    %v409 = vlaneseq
    %v410 = vshrl.u32 %v409, 7
    %v411 = vsub.s32 4, %v410
    %v412 = vrot.slane %v123, %v411
    %v413 = vlaneseq
    %v414 = vshrl.u32 %v413, 7
    %v415 = vsub.s32 4, %v414
    %v416 = vrot.slane %v124, %v415
    %v417 = vlaneseq
    %v418 = vshrl.u32 %v417, 7
    %v419 = vsub.s32 4, %v418
    %v420 = vrot.slane %v125, %v419
    %v421 = vlaneseq
    %v422 = vshrl.u32 %v421, 7
    %v423 = vsub.s32 4, %v422
    %v424 = vrot.slane %v126, %v423
    %vm425 = vcmp.eq.s32.totalorder %v400, 1
    %vm426 = vcmp.eq.s32.totalorder %v404, 1
    %vm427 = vcmp.eq.s32.totalorder %v408, 1
    %vm428 = vcmp.eq.s32.totalorder %v412, 1
    %vm429 = vcmp.eq.s32.totalorder %v416, 1
    %vm430 = vcmp.eq.s32.totalorder %v420, 1
    %vm431 = vcmp.eq.s32.totalorder %v424, 1
    %vm432 = vmand %vm395, %vm425
    %vm433 = vmand %vm395, %vm426
    %vm434 = vmand %vm395, %vm427
    %vm435 = vmand %vm395, %vm428
    %vm436 = vmand %vm395, %vm429
    %vm437 = vmand %vm395, %vm430
    %vm438 = vmand %vm395, %vm431
    %vm439 = vmand %vm396, %vm425
    %vm440 = vmand %vm396, %vm426
    %vm441 = vmand %vm396, %vm427
    %vm442 = vmand %vm396, %vm428
    %vm443 = vmand %vm396, %vm429
    %vm444 = vmand %vm396, %vm430
    %vm445 = vmand %vm396, %vm431
    %v446 = vsel %vm432, %v57, 0.0
    %v447 = vsel %vm433, %v58, 0.0
    %v448 = vsel %vm434, %v59, 0.0
    %v449 = vsel %vm435, %v60, 0.0
    %v450 = vsel %vm436, %v61, 0.0
    %v451 = vsel %vm437, %v62, 0.0
    %v452 = vsel %vm438, %v63, 0.0
    %v453 = vsel %vm439, %v64, 0.0
    %v454 = vsel %vm440, %v65, 0.0
    %v455 = vsel %vm441, %v66, 0.0
    %v456 = vsel %vm442, %v67, 0.0
    %v457 = vsel %vm443, %v68, 0.0
    %v458 = vsel %vm444, %v69, 0.0
    %v459 = vsel %vm445, %v70, 0.0
    %v460 = vrsqrt.pop %v446
    %v461 = vmul.f32 %v446, %v460
    %vm462 = vcmp.eq.f32.partialorder %v446, inf
    %v463 = vsel %vm462, %v446, %v461
    %vm464 = vcmp.eq.f32.partialorder %v446, 0.0
    %v465 = vand.u32 %v446, 2147483648
    %v466 = vsel %vm464, %v465, %v463
    %v467 = vrsqrt.pop %v447
    %v468 = vmul.f32 %v447, %v467
    %vm469 = vcmp.eq.f32.partialorder %v447, inf
    %v470 = vsel %vm469, %v447, %v468
    %vm471 = vcmp.eq.f32.partialorder %v447, 0.0
    %v472 = vand.u32 %v447, 2147483648
    %v473 = vsel %vm471, %v472, %v470
    %v474 = vrsqrt.pop %v448
    %v475 = vmul.f32 %v448, %v474
    %vm476 = vcmp.eq.f32.partialorder %v448, inf
    %v477 = vsel %vm476, %v448, %v475
    %vm478 = vcmp.eq.f32.partialorder %v448, 0.0
    %v479 = vand.u32 %v448, 2147483648
    %v480 = vsel %vm478, %v479, %v477
    %v481 = vrsqrt.pop %v449
    %v482 = vmul.f32 %v449, %v481
    %vm483 = vcmp.eq.f32.partialorder %v449, inf
    %v484 = vsel %vm483, %v449, %v482
    %vm485 = vcmp.eq.f32.partialorder %v449, 0.0
    %v486 = vand.u32 %v449, 2147483648
    %v487 = vsel %vm485, %v486, %v484
    %v488 = vrsqrt.pop %v450
    %v489 = vmul.f32 %v450, %v488
    %vm490 = vcmp.eq.f32.partialorder %v450, inf
    %v491 = vsel %vm490, %v450, %v489
    %vm492 = vcmp.eq.f32.partialorder %v450, 0.0
    %v493 = vand.u32 %v450, 2147483648
    %v494 = vsel %vm492, %v493, %v491
    %v495 = vrsqrt.pop %v451
    %v496 = vmul.f32 %v451, %v495
    %vm497 = vcmp.eq.f32.partialorder %v451, inf
    %v498 = vsel %vm497, %v451, %v496
    %vm499 = vcmp.eq.f32.partialorder %v451, 0.0
    %v500 = vand.u32 %v451, 2147483648
    %v501 = vsel %vm499, %v500, %v498
    %v502 = vrsqrt.pop %v452
    %v503 = vmul.f32 %v452, %v502
    %vm504 = vcmp.eq.f32.partialorder %v452, inf
    %v505 = vsel %vm504, %v452, %v503
    %vm506 = vcmp.eq.f32.partialorder %v452, 0.0
    %v507 = vand.u32 %v452, 2147483648
    %v508 = vsel %vm506, %v507, %v505
    %v509 = vrsqrt.pop %v453
    %v510 = vmul.f32 %v453, %v509
    %vm511 = vcmp.eq.f32.partialorder %v453, inf
    %v512 = vsel %vm511, %v453, %v510
    %vm513 = vcmp.eq.f32.partialorder %v453, 0.0
    %v514 = vand.u32 %v453, 2147483648
    %v515 = vsel %vm513, %v514, %v512
    %v516 = vrsqrt.pop %v454
    %v517 = vmul.f32 %v454, %v516
    %vm518 = vcmp.eq.f32.partialorder %v454, inf
    %v519 = vsel %vm518, %v454, %v517
    %vm520 = vcmp.eq.f32.partialorder %v454, 0.0
    %v521 = vand.u32 %v454, 2147483648
    %v522 = vsel %vm520, %v521, %v519
    %v523 = vrsqrt.pop %v455
    %v524 = vmul.f32 %v455, %v523
    %vm525 = vcmp.eq.f32.partialorder %v455, inf
    %v526 = vsel %vm525, %v455, %v524
    %vm527 = vcmp.eq.f32.partialorder %v455, 0.0
    %v528 = vand.u32 %v455, 2147483648
    %v529 = vsel %vm527, %v528, %v526
    %v530 = vrsqrt.pop %v456
    %v531 = vmul.f32 %v456, %v530
    %vm532 = vcmp.eq.f32.partialorder %v456, inf
    %v533 = vsel %vm532, %v456, %v531
    %vm534 = vcmp.eq.f32.partialorder %v456, 0.0
    %v535 = vand.u32 %v456, 2147483648
    %v536 = vsel %vm534, %v535, %v533
    %v537 = vrsqrt.pop %v457
    %v538 = vmul.f32 %v457, %v537
    %vm539 = vcmp.eq.f32.partialorder %v457, inf
    %v540 = vsel %vm539, %v457, %v538
    %vm541 = vcmp.eq.f32.partialorder %v457, 0.0
    %v542 = vand.u32 %v457, 2147483648
    %v543 = vsel %vm541, %v542, %v540
    %v544 = vrsqrt.pop %v458
    %v545 = vmul.f32 %v458, %v544
    %vm546 = vcmp.eq.f32.partialorder %v458, inf
    %v547 = vsel %vm546, %v458, %v545
    %vm548 = vcmp.eq.f32.partialorder %v458, 0.0
    %v549 = vand.u32 %v458, 2147483648
    %v550 = vsel %vm548, %v549, %v547
    %v551 = vrsqrt.pop %v459
    %v552 = vmul.f32 %v459, %v551
    %vm553 = vcmp.eq.f32.partialorder %v459, inf
    %v554 = vsel %vm553, %v459, %v552
    %vm555 = vcmp.eq.f32.partialorder %v459, 0.0
    %v556 = vand.u32 %v459, 2147483648
    %v557 = vsel %vm555, %v556, %v554
    %v558 = vsel %vm432, %v85, 0.0
    %v559 = vsel %vm433, %v86, 0.0
    %v560 = vsel %vm434, %v87, 0.0
    %v561 = vsel %vm435, %v88, 0.0
    %v562 = vsel %vm436, %v89, 0.0
    %v563 = vsel %vm437, %v90, 0.0
    %v564 = vsel %vm438, %v91, 0.0
    %v565 = vsel %vm439, %v92, 0.0
    %v566 = vsel %vm440, %v93, 0.0
    %v567 = vsel %vm441, %v94, 0.0
    %v568 = vsel %vm442, %v95, 0.0
    %v569 = vsel %vm443, %v96, 0.0
    %v570 = vsel %vm444, %v97, 0.0
    %v571 = vsel %vm445, %v98, 0.0
    %v572 = vrsqrt.pop %v558
    %v573 = vmul.f32 %v558, %v572
    %vm574 = vcmp.eq.f32.partialorder %v558, inf
    %v575 = vsel %vm574, %v558, %v573
    %vm576 = vcmp.eq.f32.partialorder %v558, 0.0
    %v577 = vand.u32 %v558, 2147483648
    %v578 = vsel %vm576, %v577, %v575
    %v579 = vrsqrt.pop %v559
    %v580 = vmul.f32 %v559, %v579
    %vm581 = vcmp.eq.f32.partialorder %v559, inf
    %v582 = vsel %vm581, %v559, %v580
    %vm583 = vcmp.eq.f32.partialorder %v559, 0.0
    %v584 = vand.u32 %v559, 2147483648
    %v585 = vsel %vm583, %v584, %v582
    %v586 = vrsqrt.pop %v560
    %v587 = vmul.f32 %v560, %v586
    %vm588 = vcmp.eq.f32.partialorder %v560, inf
    %v589 = vsel %vm588, %v560, %v587
    %vm590 = vcmp.eq.f32.partialorder %v560, 0.0
    %v591 = vand.u32 %v560, 2147483648
    %v592 = vsel %vm590, %v591, %v589
    %v593 = vrsqrt.pop %v561
    %v594 = vmul.f32 %v561, %v593
    %vm595 = vcmp.eq.f32.partialorder %v561, inf
    %v596 = vsel %vm595, %v561, %v594
    %vm597 = vcmp.eq.f32.partialorder %v561, 0.0
    %v598 = vand.u32 %v561, 2147483648
    %v599 = vsel %vm597, %v598, %v596
    %v600 = vrsqrt.pop %v562
    %v601 = vmul.f32 %v562, %v600
    %vm602 = vcmp.eq.f32.partialorder %v562, inf
    %v603 = vsel %vm602, %v562, %v601
    %vm604 = vcmp.eq.f32.partialorder %v562, 0.0
    %v605 = vand.u32 %v562, 2147483648
    %v606 = vsel %vm604, %v605, %v603
    %v607 = vrsqrt.pop %v563
    %v608 = vmul.f32 %v563, %v607
    %vm609 = vcmp.eq.f32.partialorder %v563, inf
    %v610 = vsel %vm609, %v563, %v608
    %vm611 = vcmp.eq.f32.partialorder %v563, 0.0
    %v612 = vand.u32 %v563, 2147483648
    %v613 = vsel %vm611, %v612, %v610
    %v614 = vrsqrt.pop %v564
    %v615 = vmul.f32 %v564, %v614
    %vm616 = vcmp.eq.f32.partialorder %v564, inf
    %v617 = vsel %vm616, %v564, %v615
    %vm618 = vcmp.eq.f32.partialorder %v564, 0.0
    %v619 = vand.u32 %v564, 2147483648
    %v620 = vsel %vm618, %v619, %v617
    %v621 = vrsqrt.pop %v565
    %v622 = vmul.f32 %v565, %v621
    %vm623 = vcmp.eq.f32.partialorder %v565, inf
    %v624 = vsel %vm623, %v565, %v622
    %vm625 = vcmp.eq.f32.partialorder %v565, 0.0
    %v626 = vand.u32 %v565, 2147483648
    %v627 = vsel %vm625, %v626, %v624
    %v628 = vrsqrt.pop %v566
    %v629 = vmul.f32 %v566, %v628
    %vm630 = vcmp.eq.f32.partialorder %v566, inf
    %v631 = vsel %vm630, %v566, %v629
    %vm632 = vcmp.eq.f32.partialorder %v566, 0.0
    %v633 = vand.u32 %v566, 2147483648
    %v634 = vsel %vm632, %v633, %v631
    %v635 = vrsqrt.pop %v567
    %v636 = vmul.f32 %v567, %v635
    %vm637 = vcmp.eq.f32.partialorder %v567, inf
    %v638 = vsel %vm637, %v567, %v636
    %vm639 = vcmp.eq.f32.partialorder %v567, 0.0
    %v640 = vand.u32 %v567, 2147483648
    %v641 = vsel %vm639, %v640, %v638
    %v642 = vrsqrt.pop %v568
    %v643 = vmul.f32 %v568, %v642
    %vm644 = vcmp.eq.f32.partialorder %v568, inf
    %v645 = vsel %vm644, %v568, %v643
    %vm646 = vcmp.eq.f32.partialorder %v568, 0.0
    %v647 = vand.u32 %v568, 2147483648
    %v648 = vsel %vm646, %v647, %v645
    %v649 = vrsqrt.pop %v569
    %v650 = vmul.f32 %v569, %v649
    %vm651 = vcmp.eq.f32.partialorder %v569, inf
    %v652 = vsel %vm651, %v569, %v650
    %vm653 = vcmp.eq.f32.partialorder %v569, 0.0
    %v654 = vand.u32 %v569, 2147483648
    %v655 = vsel %vm653, %v654, %v652
    %v656 = vrsqrt.pop %v570
    %v657 = vmul.f32 %v570, %v656
    %vm658 = vcmp.eq.f32.partialorder %v570, inf
    %v659 = vsel %vm658, %v570, %v657
    %vm660 = vcmp.eq.f32.partialorder %v570, 0.0
    %v661 = vand.u32 %v570, 2147483648
    %v662 = vsel %vm660, %v661, %v659
    %v663 = vrsqrt.pop %v571
    %v664 = vmul.f32 %v571, %v663
    %vm665 = vcmp.eq.f32.partialorder %v571, inf
    %v666 = vsel %vm665, %v571, %v664
    %vm667 = vcmp.eq.f32.partialorder %v571, 0.0
    %v668 = vand.u32 %v571, 2147483648
    %v669 = vsel %vm667, %v668, %v666
    %v670 = vsub.f32 %v466, %v578
    %v671 = vsub.f32 %v473, %v585
    %v672 = vsub.f32 %v480, %v592
    %v673 = vsub.f32 %v487, %v599
    %v674 = vsub.f32 %v494, %v606
    %v675 = vsub.f32 %v501, %v613
    %v676 = vsub.f32 %v508, %v620
    %v677 = vsub.f32 %v515, %v627
    %v678 = vsub.f32 %v522, %v634
    %v679 = vsub.f32 %v529, %v641
    %v680 = vsub.f32 %v536, %v648
    %v681 = vsub.f32 %v543, %v655
    %v682 = vsub.f32 %v550, %v662
    %v683 = vsub.f32 %v557, %v669
    %v684 = vmul.f32 %v670, %v670
    %v685 = vmul.f32 %v671, %v671
    %v686 = vmul.f32 %v672, %v672
    %v687 = vmul.f32 %v673, %v673
    %v688 = vmul.f32 %v674, %v674
    %v689 = vmul.f32 %v675, %v675
    %v690 = vmul.f32 %v676, %v676
    %v691 = vmul.f32 %v677, %v677
    %v692 = vmul.f32 %v678, %v678
    %v693 = vmul.f32 %v679, %v679
    %v694 = vmul.f32 %v680, %v680
    %v695 = vmul.f32 %v681, %v681
    %v696 = vmul.f32 %v682, %v682
    %v697 = vmul.f32 %v683, %v683
    %v698 = vmul.f32 %v684, 5.0
    %v699 = vmul.f32 %v685, 5.0
    %v700 = vmul.f32 %v686, 5.0
    %v701 = vmul.f32 %v687, 5.0
    %v702 = vmul.f32 %v688, 5.0
    %v703 = vmul.f32 %v689, 5.0
    %v704 = vmul.f32 %v690, 5.0
    %v705 = vmul.f32 %v691, 5.0
    %v706 = vmul.f32 %v692, 5.0
    %v707 = vmul.f32 %v693, 5.0
    %v708 = vmul.f32 %v694, 5.0
    %v709 = vmul.f32 %v695, 5.0
    %v710 = vmul.f32 %v696, 5.0
    %v711 = vmul.f32 %v697, 5.0
    %v712 = vadd.f32 %v351, %v352
    %v713 = vadd.f32 %v358, %v359
    %v714 = vadd.f32 %v365, %v366
    %v715 = vadd.f32 %v372, %v373
    %v716 = vadd.f32 %v712, %v353
    %v717 = vadd.f32 %v713, %v360
    %v718 = vadd.f32 %v714, %v367
    %v719 = vadd.f32 %v715, %v374
    %v720 = vadd.f32 %v716, %v354
    %v721 = vadd.f32 %v717, %v361
    %v722 = vadd.f32 %v718, %v368
    %v723 = vadd.f32 %v719, %v375
    %v724 = vadd.f32 %v720, %v355
    %v725 = vadd.f32 %v721, %v362
    %v726 = vadd.f32 %v722, %v369
    %v727 = vadd.f32 %v723, %v376
    %v728 = vadd.f32 %v724, %v356
    %v729 = vadd.f32 %v725, %v363
    %v730 = vadd.f32 %v726, %v370
    %v731 = vadd.f32 %v727, %v377
    %v732 = vadd.f32 %v728, %v357
    %v733 = vadd.f32 %v729, %v364
    %v734 = vadd.f32 %v730, %v371
    %v735 = vadd.f32 %v731, %v378
    %v736 = vadd.f32 %v698, %v699
    %v737 = vadd.f32 %v705, %v706
    %v738 = vadd.f32 %v736, %v700
    %v739 = vadd.f32 %v737, %v707
    %v740 = vadd.f32 %v738, %v701
    %v741 = vadd.f32 %v739, %v708
    %v742 = vadd.f32 %v740, %v702
    %v743 = vadd.f32 %v741, %v709
    %v744 = vadd.f32 %v742, %v703
    %v745 = vadd.f32 %v743, %v710
    %v746 = vadd.f32 %v744, %v704
    %v747 = vadd.f32 %v745, %v711
    %v748 = vld [vmem:[#allocation2] sm:$0xff]
    %v749 = vadd.f32 %v732, %v733
    %v750 = vadd.f32 %v749, %v734
    %v751 = vadd.f32 %v750, %v735
    %v752 = vadd.f32 %v751, %v746
    %v753 = vadd.f32 %v752, %v747
    %v754 = vadd.f32 %v748, %v753
    %755 = vst [vmem:[#allocation2] sm:$0xff] %v754
    // Predicated region
    $region22: #{tpu_custom_call.1} parent=1 // pred_check
      %p756 = pneg %p52
    $region23: #{tpu_custom_call.1} parent=1 // pred_check_branch
      %758 = sbr.rel (%p756) target = $region25
    $region24: #{tpu_custom_call.1} parent=1 // pred_region
      %v759 = vld [vmem:[#allocation2] sm:$0xff]
      %760 = vst [vmem:[#allocation8] sm:$0xff] %v759
    $region25: #{tpu_custom_call.1} parent=1 // pred_fallthru
      _
    // Predicated region
    $region26: #{tpu_custom_call.1} parent=1 // pred_check
      _
    $region27: #{tpu_custom_call.1} parent=1 // pred_check_branch
      %762 = sbr.rel (0) target = $region29
    $region28: #{tpu_custom_call.1} parent=1 // pred_region
      %s764 = ssub.s32 128, 128
      %765 = vsyncadd [#allocation5], %s764
      %s767 = sshll.u32 [#allocation8], 4
      %s768 = int_to_ptr.vmem [resolvable:$true] %s767
      %770 = dma.vmem_to_hbm [thread:$0]  %s768, 128, %s2, [#allocation5]
    $region29: #{tpu_custom_call.1} parent=1 // pred_fallthru
      _
    // Predicated region
    $region30: #{tpu_custom_call.1} parent=1 // pred_check
      _
    $region31: #{tpu_custom_call.1} parent=1 // pred_check_branch
      %772 = sbr.rel (0) target = $region33
    $region32: #{tpu_custom_call.1} parent=1 // pred_region
      %773 = dma.done [#allocation5], 128
    $region33: #{tpu_custom_call.1} parent=1 // pred_fallthru
      _
    %774 = vsyncpa [#allocation4], 1
    %775 = vsyncpa [#allocation7], 1
    %776 = vsyncpa [#allocation5], 1

</llo_original>
